<compile_context>
chip_gen: v6e
topology: v6e:2x2x1
jax: 0.10.0
libtpu: 0.0.40
codegen_flags: <defaults>
</compile_context>

<pallas_src>
import math

import jax
import jax.numpy as jnp
from jax import lax
from jax.experimental import pallas as pl
from jax.experimental.pallas import tpu as pltpu


def _proj_kernel(graph_ref, feat_ref, a_ref, b_ref, w_ref, out_ref):
    g = graph_ref[0]                      # [K, NH]
    f = feat_ref[0]                       # [C, THW]   (HW on lanes)
    a = a_ref[...]                        # [1, C]
    b = b_ref[...]                        # [1, NH]
    w = w_ref[...]                        # [NH, C_out]

    # feature part of the score: M=1 matvec with lane-dense N -> [1, THW]
    score_f = jnp.dot(a, f, preferred_element_type=jnp.float32)

    # graph part of the score: tiny VPU multiply + lane reduce -> [K, 1]
    score_g = jnp.sum(g * b, axis=1, keepdims=True)

    # scores [K, THW]: K on sublanes, HW on lanes; softmax over K (axis 0)
    s = score_g + score_f
    s = s - jnp.max(s, axis=0, keepdims=True)
    e = jnp.exp(s)
    denom = jnp.sum(e, axis=0, keepdims=True)                   # [1, THW]
    probs = e * pl.reciprocal(denom, approx=True)               # [K, THW]

    # new_weight^T = (graph @ weight)^T : contract NH -> [C_out, K]
    nw_t = lax.dot_general(w, g, (((0,), (1,)), ((), ())),
                           preferred_element_type=jnp.float32)

    # output [C_out, THW] -> lane-dense store over HW, then ReLU
    out = jnp.dot(nw_t, probs, preferred_element_type=jnp.float32)
    out_ref[0] = jnp.maximum(out, 0.0).astype(out_ref.dtype)


def _choose_hw_tile(hw, c, c_out, budget_bytes=12 << 20, max_tile=4096):
    """Largest multiple of 128 dividing HW whose double-buffered feat+out tiles
    fit a conservative VMEM budget (safe on v7x's 32 MiB scoped default)."""
    if hw % 128 != 0:
        return hw  # full-extent block is always legal
    best = 128
    t = 128
    limit = min(hw, max_tile)
    while t <= limit:
        if hw % t == 0 and 2 * 4 * t * (c + c_out) <= budget_bytes:
            best = t
        t += 128
    return best


def graph_to_feature_map_projection(in_graph, in_feature, graph_to_feature_matrix,
                                    weight, *, hw_tile=None):
    """
    in_graph:                [1, B, K, NH]  float32
    in_feature:              [B, C, H, W]   float32 (NCHW, like PyTorch)
    graph_to_feature_matrix: [C + NH, 1]
    weight:                  [NH, C_out]    (C_out must equal C for the final view)
    returns:                 [B, C, H, W]
    """
    _, B, K, NH = in_graph.shape
    Bf, C, H, W = in_feature.shape
    assert Bf == B
    HW = H * W
    C_out = weight.shape[1]
    assert C_out == C, "final view requires out_features == n_channels"
    assert graph_to_feature_matrix.shape == (C + NH, 1)

    if hw_tile is None:
        hw_tile = _choose_hw_tile(HW, C, C_out)
    assert HW % hw_tile == 0 and (hw_tile % 128 == 0 or hw_tile == HW)
    n_hw_tiles = HW // hw_tile

    # layout glue: all free views, no HBM transpose round trips
    graph = in_graph.reshape(B, K, NH)                     # drop leading 1
    feat = in_feature.reshape(B, C, HW)                    # NCHW -> [B, C, HW]
    a_row = graph_to_feature_matrix[:C].reshape(1, C)      # [1, C]   (lane-dense)
    b_row = graph_to_feature_matrix[C:].reshape(1, NH)     # [1, NH]  (lane-dense)

    out = pl.pallas_call(
        _proj_kernel,
        out_shape=jax.ShapeDtypeStruct((B, C_out, HW), jnp.float32),
        grid_spec=pltpu.PrefetchScalarGridSpec(
            num_scalar_prefetch=0,
            grid=(B, n_hw_tiles),
            in_specs=[
                pl.BlockSpec((1, K, NH), lambda b, j: (b, 0, 0)),
                pl.BlockSpec((1, C, hw_tile), lambda b, j: (b, 0, j)),
                pl.BlockSpec((1, C), lambda b, j: (0, 0)),
                pl.BlockSpec((1, NH), lambda b, j: (0, 0)),
                pl.BlockSpec((NH, C_out), lambda b, j: (0, 0)),
            ],
            out_specs=pl.BlockSpec((1, C_out, hw_tile), lambda b, j: (b, 0, j)),
        ),
        compiler_params=pltpu.CompilerParams(
            dimension_semantics=("parallel", "parallel"),
            vmem_limit_bytes=32 * 1024 * 1024,
        ),
    )(graph, feat, a_row, b_row, weight)

    # [B, C_out, HW] -> NCHW is a free reshape (no transpose)
    return out.reshape(B, C, H, W)


def _xavier_uniform(key, shape):
    # torch.nn.init.xavier_uniform_ for a 2D tensor: fan_in=shape[1], fan_out=shape[0]
    fan_out, fan_in = shape[0], shape[1]
    bound = math.sqrt(6.0 / (fan_in + fan_out))
    return jax.random.uniform(key, shape, jnp.float32, minval=-bound, maxval=bound)


def _reference(in_graph, in_feature, gfm, weight):
    # pure-JAX reference mirroring the PyTorch forward
    _, B, K, NH = in_graph.shape
    Bf, C, H, W = in_feature.shape
    HW = H * W
    feat = jnp.transpose(in_feature.reshape(B, C, HW), (0, 2, 1))                    # [B, HW, C]
    graph = in_graph[0]                                                              # [B, K, NH]
    score = (feat @ gfm[:C])[:, :, None, 0] + (graph @ gfm[C:])[:, None, :, 0]       # [B, HW, K]
    probs = jax.nn.softmax(score, axis=-1)
    nw = graph @ weight                                                              # [B, K, C_out]
    out = jnp.einsum("bpk,bkc->bpc", probs, nw)                                      # [B, HW, C_out]
    out = jnp.transpose(out, (0, 2, 1)).reshape(B, C, H, W)
    return jax.nn.relu(out)


if __name__ == "__main__":
    # small shapes consistent with the module (in_features == out_features == C)
    B, C, H, W = 2, 32, 16, 16     # HW = 256 (multiple of 128 -> lane-dense tiles)
    NH = 32                        # n_hiddens
    K = 8                          # n_classes (graph nodes used in forward)

    key = jax.random.PRNGKey(0)
    k1, k2, k3, k4 = jax.random.split(key, 4)

    in_graph = jax.random.normal(k1, (1, B, K, NH), jnp.float32)
    in_feature = jax.random.normal(k2, (B, C, H, W), jnp.float32)

    graph_to_feature_matrix = _xavier_uniform(k3, (C + NH, 1))
    weight = _xavier_uniform(k4, (NH, C))

    ref = _reference(in_graph, in_feature, graph_to_feature_matrix, weight)

    # default (auto-chosen HW tile)
    out = graph_to_feature_map_projection(in_graph, in_feature,
                                          graph_to_feature_matrix, weight)
    out = jax.block_until_ready(out)
    assert out.shape == in_feature.shape
    # tolerance loosened slightly for pl.reciprocal(approx=True) in the softmax
    assert jnp.allclose(out, ref, atol=2e-3, rtol=2e-3)

    # explicitly exercise the HW-tiled path (two 128-lane tiles per batch)
    out_tiled = graph_to_feature_map_projection(in_graph, in_feature,
                                                graph_to_feature_matrix, weight,
                                                hw_tile=128)
    out_tiled = jax.block_until_ready(out_tiled)
    assert jnp.allclose(out_tiled, ref, atol=2e-3, rtol=2e-3)

    print("KERNEL_OK")
</pallas_src>

<mosaic_0001>
module attributes {stable_mosaic.version = 11 : i64} {
  func.func @_proj_kernel(%arg0: i32, %arg1: i32, %arg2: memref<1x8x32xf32, #tpu.memory_space<vmem>>, %arg3: memref<1x32x256xf32, #tpu.memory_space<vmem>>, %arg4: memref<1x32xf32, #tpu.memory_space<vmem>>, %arg5: memref<1x32xf32, #tpu.memory_space<vmem>>, %arg6: memref<32x32xf32, #tpu.memory_space<vmem>>, %arg7: memref<1x32x256xf32, #tpu.memory_space<vmem>>) attributes {dimension_semantics = [#tpu.dimension_semantics<parallel>, #tpu.dimension_semantics<parallel>], iteration_bounds = array<i64: 2, 1>, scalar_prefetch = 0 : i64, scratch_operands = 0 : i64, tpu.core_type = #tpu.core_type<tc>, window_params = [{transform_indices = @transform_0, window_bounds = array<i64: 1, 8, 32>}, {transform_indices = @transform_1, window_bounds = array<i64: 1, 32, 256>}, {pipeline_mode = #tpu.pipeline_mode<synchronous>, transform_indices = @transform_2, window_bounds = array<i64: 1, 32>}, {pipeline_mode = #tpu.pipeline_mode<synchronous>, transform_indices = @transform_3, window_bounds = array<i64: 1, 32>}, {pipeline_mode = #tpu.pipeline_mode<synchronous>, transform_indices = @transform_4, window_bounds = array<i64: 32, 32>}, {transform_indices = @transform_5, window_bounds = array<i64: 1, 32, 256>}]} {
    %c0 = arith.constant 0 : index
    %c0_0 = arith.constant 0 : index
    %c0_1 = arith.constant 0 : index
    %0 = vector.load %arg2[%c0, %c0_0, %c0_1] : memref<1x8x32xf32, #tpu.memory_space<vmem>>, vector<1x8x32xf32>
    %1 = vector.shape_cast %0 : vector<1x8x32xf32> to vector<8x32xf32>
    %c0_2 = arith.constant 0 : index
    %c0_3 = arith.constant 0 : index
    %c0_4 = arith.constant 0 : index
    %2 = vector.load %arg3[%c0_2, %c0_3, %c0_4] : memref<1x32x256xf32, #tpu.memory_space<vmem>>, vector<1x32x256xf32>
    %3 = vector.shape_cast %2 : vector<1x32x256xf32> to vector<32x256xf32>
    %c0_5 = arith.constant 0 : index
    %c0_6 = arith.constant 0 : index
    %4 = vector.load %arg4[%c0_5, %c0_6] : memref<1x32xf32, #tpu.memory_space<vmem>>, vector<1x32xf32>
    %c0_7 = arith.constant 0 : index
    %c0_8 = arith.constant 0 : index
    %5 = vector.load %arg5[%c0_7, %c0_8] : memref<1x32xf32, #tpu.memory_space<vmem>>, vector<1x32xf32>
    %c0_9 = arith.constant 0 : index
    %c0_10 = arith.constant 0 : index
    %6 = vector.load %arg6[%c0_9, %c0_10] : memref<32x32xf32, #tpu.memory_space<vmem>>, vector<32x32xf32>
    %cst = arith.constant dense<0.000000e+00> : vector<1x256xf32>
    %7 = tpu.matmul %4, %3, %cst {dimension_numbers = #tpu.dot_dimension_numbers<[1], [0], [0], [1], [0, 0, 1, 1], [], []>} : vector<1x32xf32>, vector<32x256xf32>, vector<1x256xf32> -> vector<1x256xf32>
    %8 = vector.broadcast %5 : vector<1x32xf32> to vector<8x32xf32>
    %9 = arith.mulf %1, %8 : vector<8x32xf32>
    %cst_11 = arith.constant dense<0.000000e+00> : vector<8xf32>
    %10 = vector.multi_reduction <add>, %9, %cst_11 [1] : vector<8x32xf32> to vector<8xf32>
    %11 = vector.shape_cast %10 : vector<8xf32> to vector<8x1xf32>
    %12 = vector.broadcast %11 : vector<8x1xf32> to vector<8x256xf32>
    %13 = vector.broadcast %7 : vector<1x256xf32> to vector<8x256xf32>
    %14 = arith.addf %12, %13 : vector<8x256xf32>
    %cst_12 = arith.constant dense<0xFF800000> : vector<256xf32>
    %15 = vector.multi_reduction <maximumf>, %14, %cst_12 [0] : vector<8x256xf32> to vector<256xf32>
    %16 = vector.shape_cast %15 : vector<256xf32> to vector<1x256xf32>
    %17 = vector.broadcast %16 : vector<1x256xf32> to vector<8x256xf32>
    %18 = arith.subf %14, %17 : vector<8x256xf32>
    %19 = math.exp %18 : vector<8x256xf32>
    %cst_13 = arith.constant dense<0.000000e+00> : vector<256xf32>
    %20 = vector.multi_reduction <add>, %19, %cst_13 [0] : vector<8x256xf32> to vector<256xf32>
    %21 = vector.shape_cast %20 : vector<256xf32> to vector<1x256xf32>
    %22 = tpu.reciprocal %21 {approx = true} : vector<1x256xf32> -> vector<1x256xf32>
    %23 = vector.broadcast %22 : vector<1x256xf32> to vector<8x256xf32>
    %24 = arith.mulf %19, %23 : vector<8x256xf32>
    %cst_14 = arith.constant dense<0.000000e+00> : vector<32x8xf32>
    %25 = tpu.matmul %6, %1, %cst_14 {dimension_numbers = #tpu.dot_dimension_numbers<[0], [1], [1], [0], [0, 1, 1, 0], [], []>} : vector<32x32xf32>, vector<8x32xf32>, vector<32x8xf32> -> vector<32x8xf32>
    %cst_15 = arith.constant dense<0.000000e+00> : vector<32x256xf32>
    %26 = tpu.matmul %25, %24, %cst_15 {dimension_numbers = #tpu.dot_dimension_numbers<[1], [0], [0], [1], [0, 0, 1, 1], [], []>} : vector<32x8xf32>, vector<8x256xf32>, vector<32x256xf32> -> vector<32x256xf32>
    %cst_16 = arith.constant 0.000000e+00 : f32
    %27 = vector.broadcast %cst_16 : f32 to vector<32x256xf32>
    %28 = arith.maximumf %26, %27 : vector<32x256xf32>
    %c0_17 = arith.constant 0 : index
    %c0_18 = arith.constant 0 : index
    %c0_19 = arith.constant 0 : index
    %29 = vector.load %arg7[%c0_17, %c0_18, %c0_19] : memref<1x32x256xf32, #tpu.memory_space<vmem>>, vector<1x32x256xf32>
    %30 = vector.shape_cast %29 : vector<1x32x256xf32> to vector<32x256xf32>
    %31 = vector.shape_cast %28 : vector<32x256xf32> to vector<1x32x256xf32>
    tpu.vector_store %arg7[%c0_17, %c0_18, %c0_19], %31 {strides = array<i32>} : memref<1x32x256xf32, #tpu.memory_space<vmem>>, vector<1x32x256xf32>,
    return
  }
  func.func @transform_0(%arg0: i32, %arg1: i32) -> (i32, i32, i32) {
    %c0_i32 = arith.constant 0 : i32
    %c0_i32_0 = arith.constant 0 : i32
    %c0_i32_1 = arith.constant 0 : i32
    return %arg0, %c0_i32, %c0_i32_0 : i32, i32, i32
  }
  func.func @transform_1(%arg0: i32, %arg1: i32) -> (i32, i32, i32) {
    %c0_i32 = arith.constant 0 : i32
    %c0_i32_0 = arith.constant 0 : i32
    return %arg0, %c0_i32, %arg1 : i32, i32, i32
  }
  func.func @transform_2(%arg0: i32, %arg1: i32) -> (i32, i32) {
    %c0_i32 = arith.constant 0 : i32
    %c0_i32_0 = arith.constant 0 : i32
    %c0_i32_1 = arith.constant 0 : i32
    return %c0_i32, %c0_i32_0 : i32, i32
  }
  func.func @transform_3(%arg0: i32, %arg1: i32) -> (i32, i32) {
    %c0_i32 = arith.constant 0 : i32
    %c0_i32_0 = arith.constant 0 : i32
    %c0_i32_1 = arith.constant 0 : i32
    return %c0_i32, %c0_i32_0 : i32, i32
  }
  func.func @transform_4(%arg0: i32, %arg1: i32) -> (i32, i32) {
    %c0_i32 = arith.constant 0 : i32
    %c0_i32_0 = arith.constant 0 : i32
    %c0_i32_1 = arith.constant 0 : i32
    return %c0_i32, %c0_i32_0 : i32, i32
  }
  func.func @transform_5(%arg0: i32, %arg1: i32) -> (i32, i32, i32) {
    %c0_i32 = arith.constant 0 : i32
    %c0_i32_0 = arith.constant 0 : i32
    return %arg0, %c0_i32, %arg1 : i32, i32, i32
  }
}

</mosaic_0001>

<llo_original>
// kernel: tpu_custom_call.1
$region0: #{tpu_custom_call.1}
  #allocation0 [shape = 'u32[]', space=smem, size = 0x4, offset = 0x4, fixed_abs, tag = 'smem constant byte address 0x4 - core index']
  #allocation1 [shape = 'u32[144,128]{1,0:T(1,128)}', space=vmem, size = 0x12000, scoped, tag = 'internal scratch']
  %s0 = inlined_call_operand.hbm [shape: f32[2,8,32], index: 0, kind: input, shape index: {}]
  %s1 = inlined_call_operand.hbm [shape: f32[2,32,256], index: 1, kind: input, shape index: {}]
  %s2 = inlined_call_operand.vmem [shape: f32[1,32], index: 2, kind: input, shape index: {}]
  %s3 = inlined_call_operand.vmem [shape: f32[1,32], index: 3, kind: input, shape index: {}]
  %s4 = inlined_call_operand.hbm [shape: f32[32,32], index: 4, kind: input, shape index: {}]
  %s5 = inlined_call_operand.hbm [shape: f32[2,32,256], index: 5, kind: output, shape index: {}]
  %s6 = sld [smem:[#allocation0]]
  $region65: #{tpu_custom_call.1} parent=0
    _
  %s8 = ssub.s32 1, %s6
  %s9 = scalar_select 0, %s8, %s6
  $region1: #{tpu_custom_call.1} parent=0
    #allocation2 [shape = 'u8[8192]{0}', space=vmem, size = 0x2000, scoped, tag = 'input window, operand 0']
    #allocation3 [shape = 's32[2]{0}', space=sflag, size = 0x8, scoped, tag = 'scoped memory for tpu_custom_call.1']
    #allocation4 [shape = 's32[2]{0}', space=sflag, size = 0x8, scoped, tag = 'scoped memory for tpu_custom_call.1']
    #allocation5 [shape = 'u8[65536]{0}', space=vmem, size = 0x10000, scoped, tag = 'input window, operand 1']
    #allocation6 [shape = 's32[2]{0}', space=sflag, size = 0x8, scoped, tag = 'scoped memory for tpu_custom_call.1']
    #allocation7 [shape = 'u8[16384]{0}', space=vmem, size = 0x4000, scoped, tag = 'input window, operand 4, single buffered']
    #allocation8 [shape = 'u8[65536]{0}', space=vmem, size = 0x10000, scoped, tag = 'output window, operand 0']
    %10 = vsyncpa [#allocation3], 0
    %s11 = scalar_lea.sflag [#allocation3], 1
    %12 = vsyncpa %s11, 0
    %13 = vsyncpa [#allocation6], 0
    %s14 = scalar_lea.sflag [#allocation6], 1
    %15 = vsyncpa %s14, 0
    %16 = vsyncpa [#allocation4], 0
    %s17 = scalar_lea.sflag [#allocation4], 1
    %18 = vsyncpa %s17, 0
    loop: start=0, step=1, limit=4
    $region2: #{tpu_custom_call.1} parent=1 // loop_pre_header
      _
    $region3: #{tpu_custom_call.1} parent=1 // loop_header
      %s20 = sphi 0, %s24
      %p21 = scmp.ge.s32.totalorder %s20, 4
      %s27 = sphi 0, %s39
      %s28 = sphi 0, %s35
      %s29 = sphi 0, %s27
      %s30 = sphi 0, %s28
      %s31 = sphi 0, %s29
      %s32 = sphi 0, %s30
      %s42 = sphi 0, %s44
      %s45 = sphi 0, %s42
      %s46 = sphi 0, %s45
      %s62 = sphi 0, %s46
      %s70 = sphi 0, %s72
      %s73 = sphi 0, %s70
      %s74 = sphi 0, %s73
      %s90 = sphi 0, %s74
      %s94 = sphi 0, %s94
      %s96 = sphi 0, %s94
      %s97 = sphi 0, %s96
      %s111 = sphi 0, %s97
      %s115 = sphi 0, %s115
      %s117 = sphi 0, %s115
      %s118 = sphi 0, %s117
      %s132 = sphi 0, %s118
      %s136 = sphi 0, %s136
      %s138 = sphi 0, %s136
      %s139 = sphi 0, %s138
      %s153 = sphi 0, %s139
      %s161 = sphi 0, %s163
      %s164 = sphi 0, %s161
      %s165 = sphi 0, %s164
      %s181 = sphi 0, %s165
    $region4: #{tpu_custom_call.1} parent=1 // loop_header_branch
      %23 = sbr.rel (%p21) target = $region8
    $region5: #{tpu_custom_call.1} parent=1 // loop_body
      %s25 = ssub.s32 %s20, 1
      %s26 = ssub.s32 %s20, 2
      %s33 = sadd.s32 1, %s28
      %p34 = scmp.ge.s32.totalorder %s33, 1
      %s35 = scalar_select %p34, 0, %s33
      %s36 = sadd.s32 1, %s27
      %s37 = scalar_select %p34, %s36, %s27
      %p38 = scmp.ge.s32.totalorder %s37, 2
      %s39 = scalar_select %p38, 0, %s37
      %s40 = ssub.s32 %s27, %s39
      %p41 = scmp.eq.s32.totalorder %s40, 0
      %s43 = sadd.s32 %s42, 1
      %s44 = scalar_select %p41, %s42, %s43
      %p47 = pneg %p41
      %p48 = scmp.eq.s32.totalorder %s20, 1
      %p49 = por %p47, %p48
      %p50 = scmp.ne.s32.totalorder %s42, %s45
      %p51 = scmp.eq.s32.totalorder %s20, 0
      %p52 = por %p50, %p51
      %p53 = scmp.ne.s32.totalorder %s42, %s45
      %p54 = scmp.eq.s32.totalorder %s25, 1
      %p55 = por %p53, %p54
      %p56 = scmp.ne.s32.totalorder %s45, %s46
      %p57 = scmp.eq.s32.totalorder %s25, 0
      %p58 = por %p56, %p57
      %p59 = scmp.ne.s32.totalorder %s45, %s46
      %p60 = scmp.eq.s32.totalorder %s26, 1
      %p61 = por %p59, %p60
      %p63 = scmp.ne.s32.totalorder %s46, %s62
      %p64 = scmp.eq.s32.totalorder %s26, 0
      %p65 = por %p63, %p64
      %s66 = ssub.s32 %s27, %s39
      %s67 = ssub.s32 %s28, %s35
      %s68 = sor.u32 %s66, %s67
      %p69 = scmp.eq.s32.totalorder %s68, 0
      %s71 = sadd.s32 %s70, 1
      %s72 = scalar_select %p69, %s70, %s71
      %p75 = pneg %p69
      %p76 = scmp.eq.s32.totalorder %s20, 1
      %p77 = por %p75, %p76
      %p78 = scmp.ne.s32.totalorder %s70, %s73
      %p79 = scmp.eq.s32.totalorder %s20, 0
      %p80 = por %p78, %p79
      %p81 = scmp.ne.s32.totalorder %s70, %s73
      %p82 = scmp.eq.s32.totalorder %s25, 1
      %p83 = por %p81, %p82
      %p84 = scmp.ne.s32.totalorder %s73, %s74
      %p85 = scmp.eq.s32.totalorder %s25, 0
      %p86 = por %p84, %p85
      %p87 = scmp.ne.s32.totalorder %s73, %s74
      %p88 = scmp.eq.s32.totalorder %s26, 1
      %p89 = por %p87, %p88
      %p91 = scmp.ne.s32.totalorder %s74, %s90
      %p92 = scmp.eq.s32.totalorder %s26, 0
      %p93 = por %p91, %p92
      %s95 = sadd.s32 %s94, 1
      %p98 = scmp.eq.s32.totalorder %s20, 1
      %p99 = scmp.ne.s32.totalorder %s94, %s96
      %p100 = scmp.eq.s32.totalorder %s20, 0
      %p101 = por %p99, %p100
      %p102 = scmp.ne.s32.totalorder %s94, %s96
      %p103 = scmp.eq.s32.totalorder %s25, 1
      %p104 = por %p102, %p103
      %p105 = scmp.ne.s32.totalorder %s96, %s97
      %p106 = scmp.eq.s32.totalorder %s25, 0
      %p107 = por %p105, %p106
      %p108 = scmp.ne.s32.totalorder %s96, %s97
      %p109 = scmp.eq.s32.totalorder %s26, 1
      %p110 = por %p108, %p109
      %p112 = scmp.ne.s32.totalorder %s97, %s111
      %p113 = scmp.eq.s32.totalorder %s26, 0
      %p114 = por %p112, %p113
      %s116 = sadd.s32 %s115, 1
      %p119 = scmp.eq.s32.totalorder %s20, 1
      %p120 = scmp.ne.s32.totalorder %s115, %s117
      %p121 = scmp.eq.s32.totalorder %s20, 0
      %p122 = por %p120, %p121
      %p123 = scmp.ne.s32.totalorder %s115, %s117
      %p124 = scmp.eq.s32.totalorder %s25, 1
      %p125 = por %p123, %p124
      %p126 = scmp.ne.s32.totalorder %s117, %s118
      %p127 = scmp.eq.s32.totalorder %s25, 0
      %p128 = por %p126, %p127
      %p129 = scmp.ne.s32.totalorder %s117, %s118
      %p130 = scmp.eq.s32.totalorder %s26, 1
      %p131 = por %p129, %p130
      %p133 = scmp.ne.s32.totalorder %s118, %s132
      %p134 = scmp.eq.s32.totalorder %s26, 0
      %p135 = por %p133, %p134
      %s137 = sadd.s32 %s136, 1
      %p140 = scmp.eq.s32.totalorder %s20, 1
      %p141 = scmp.ne.s32.totalorder %s136, %s138
      %p142 = scmp.eq.s32.totalorder %s20, 0
      %p143 = por %p141, %p142
      %p144 = scmp.ne.s32.totalorder %s136, %s138
      %p145 = scmp.eq.s32.totalorder %s25, 1
      %p146 = por %p144, %p145
      %p147 = scmp.ne.s32.totalorder %s138, %s139
      %p148 = scmp.eq.s32.totalorder %s25, 0
      %p149 = por %p147, %p148
      %p150 = scmp.ne.s32.totalorder %s138, %s139
      %p151 = scmp.eq.s32.totalorder %s26, 1
      %p152 = por %p150, %p151
      %p154 = scmp.ne.s32.totalorder %s139, %s153
      %p155 = scmp.eq.s32.totalorder %s26, 0
      %p156 = por %p154, %p155
      %s157 = ssub.s32 %s27, %s39
      %s158 = ssub.s32 %s28, %s35
      %s159 = sor.u32 %s157, %s158
      %p160 = scmp.eq.s32.totalorder %s159, 0
      %s162 = sadd.s32 %s161, 1
      %s163 = scalar_select %p160, %s161, %s162
      %p166 = pneg %p160
      %p167 = scmp.eq.s32.totalorder %s20, 1
      %p168 = por %p166, %p167
      %p169 = scmp.ne.s32.totalorder %s161, %s164
      %p170 = scmp.eq.s32.totalorder %s20, 0
      %p171 = por %p169, %p170
      %p172 = scmp.ne.s32.totalorder %s161, %s164
      %p173 = scmp.eq.s32.totalorder %s25, 1
      %p174 = por %p172, %p173
      %p175 = scmp.ne.s32.totalorder %s164, %s165
      %p176 = scmp.eq.s32.totalorder %s25, 0
      %p177 = por %p175, %p176
      %p178 = scmp.ne.s32.totalorder %s164, %s165
      %p179 = scmp.eq.s32.totalorder %s26, 1
      %p180 = por %p178, %p179
      %p182 = scmp.ne.s32.totalorder %s165, %s181
      %p183 = scmp.eq.s32.totalorder %s26, 0
      %p184 = por %p182, %p183
      %p185 = scmp.le.s32.totalorder 1, %s20
      %p186 = scmp.lt.s32.totalorder %s20, 3
      %p187 = pnand %p185, %p186
      %p188 = pneg %p187
      // Predicated region
      $region9: #{tpu_custom_call.1} parent=5 // pred_check
        _
      $region10: #{tpu_custom_call.1} parent=5 // pred_check_branch
        %190 = sbr.rel (%p187) target = $region12
      $region11: #{tpu_custom_call.1} parent=5 // pred_region
        %s191 = ssub.s32 %s20, 1
        // Predicated region
        $region13: #{tpu_custom_call.1} parent=11 // pred_check
          %p192 = pneg %p107
        $region14: #{tpu_custom_call.1} parent=11 // pred_check_branch
          %194 = sbr.rel (%p192) target = $region16
        $region15: #{tpu_custom_call.1} parent=11 // pred_region
          _
        $region16: #{tpu_custom_call.1} parent=11 // pred_fallthru
          _
        // Predicated region
        $region17: #{tpu_custom_call.1} parent=11 // pred_check
          %p195 = pneg %p128
        $region18: #{tpu_custom_call.1} parent=11 // pred_check_branch
          %197 = sbr.rel (%p195) target = $region20
        $region19: #{tpu_custom_call.1} parent=11 // pred_region
          _
        $region20: #{tpu_custom_call.1} parent=11 // pred_fallthru
          _
        // Predicated region
        $region21: #{tpu_custom_call.1} parent=11 // pred_check
          %p198 = pneg %p149
        $region22: #{tpu_custom_call.1} parent=11 // pred_check_branch
          %200 = sbr.rel (%p198) target = $region24
        $region23: #{tpu_custom_call.1} parent=11 // pred_region
          %s202 = ssub.s32 512, 512
          %203 = vsyncadd [#allocation6], %s202
          %s204 = sshll.u32 [#allocation7], 4
          %s205 = int_to_ptr.vmem [resolvable:$true] %s204
          %210 = dma.hbm_to_vmem [thread:$0]  %s4, 512, %s205, [#allocation6], 128, 128, 8
        $region24: #{tpu_custom_call.1} parent=11 // pred_fallthru
          _
      $region12: #{tpu_custom_call.1} parent=5 // pred_fallthru
        _
      %p211 = scmp.lt.s32.totalorder %s20, 2
      // Predicated region
      $region25: #{tpu_custom_call.1} parent=5 // pred_check
        %p212 = pneg %p211
      $region26: #{tpu_custom_call.1} parent=5 // pred_check_branch
        %214 = sbr.rel (%p212) target = $region28
      $region27: #{tpu_custom_call.1} parent=5 // pred_region
        // Predicated region
        $region29: #{tpu_custom_call.1} parent=27 // pred_check
          %p215 = pneg %p52
        $region30: #{tpu_custom_call.1} parent=27 // pred_check_branch
          %217 = sbr.rel (%p215) target = $region32
        $region31: #{tpu_custom_call.1} parent=27 // pred_region
          %s218 = sand.u32 %s42, 1
          %s219 = scalar_lea.sflag [#allocation3], %s218
          %s220 = sand.u32 %s42, 1
          %s221 = smul.addr %s220, 8
          %s222 = scalar_lea.vmem [#allocation2], %s221
          %s224 = ssub.s32 128, 128
          %225 = vsyncadd %s219, %s224
          %s226 = smul.addr %s27, 128
          %s227 = scalar_lea.hbm %s0, %s226
          %s229 = sshll.u32 %s222, 4
          %s230 = int_to_ptr.vmem [resolvable:$true] %s229
          %232 = dma.hbm_to_vmem [thread:$0]  %s227, 128, %s230, %s219
        $region32: #{tpu_custom_call.1} parent=27 // pred_fallthru
          _
        // Predicated region
        $region33: #{tpu_custom_call.1} parent=27 // pred_check
          %p233 = pneg %p80
        $region34: #{tpu_custom_call.1} parent=27 // pred_check_branch
          %235 = sbr.rel (%p233) target = $region36
        $region35: #{tpu_custom_call.1} parent=27 // pred_region
          %s236 = sand.u32 %s20, 1
          %s237 = scalar_lea.sflag [#allocation6], %s236
          %s238 = sand.u32 %s70, 1
          %s239 = smul.addr %s238, 64
          %s240 = scalar_lea.vmem [#allocation5], %s239
          %s241 = smul.u32 2, %s28
          %s243 = ssub.s32 1024, 1024
          %244 = vsyncadd %s237, %s243
          %s245 = smul.addr %s27, 8
          %s246 = sadd.s32 %s241, %s245
          %s247 = smul.addr %s246, 128
          %s248 = scalar_lea.hbm %s1, %s247
          %s249 = sshll.u32 %s240, 4
          %s250 = int_to_ptr.vmem [resolvable:$true] %s249
          %255 = dma.hbm_to_vmem [thread:$0]  %s248, 1024, %s250, %s237, 256, 256, 16
        $region36: #{tpu_custom_call.1} parent=27 // pred_fallthru
          _
      $region28: #{tpu_custom_call.1} parent=5 // pred_fallthru
        _
      %p256 = scmp.le.s32.totalorder 1, %s20
      %p257 = scmp.lt.s32.totalorder %s20, 3
      %p258 = pnand %p256, %p257
      %p259 = pneg %p258
      // Predicated region
      $region37: #{tpu_custom_call.1} parent=5 // pred_check
        _
      $region38: #{tpu_custom_call.1} parent=5 // pred_check_branch
        %261 = sbr.rel (%p258) target = $region40
      $region39: #{tpu_custom_call.1} parent=5 // pred_region
        %s262 = ssub.s32 %s20, 1
        %s263 = sand.u32 %s45, 1
        %s264 = scalar_lea.sflag [#allocation3], %s263
        %s265 = sand.u32 %s45, 1
        %s266 = smul.addr %s265, 8
        %s267 = scalar_lea.vmem [#allocation2], %s266
        // Predicated region
        $region41: #{tpu_custom_call.1} parent=39 // pred_check
          %p268 = pneg %p58
        $region42: #{tpu_custom_call.1} parent=39 // pred_check_branch
          %270 = sbr.rel (%p268) target = $region44
        $region43: #{tpu_custom_call.1} parent=39 // pred_region
          %271 = dma.done %s264, 128
        $region44: #{tpu_custom_call.1} parent=39 // pred_fallthru
          _
        %s272 = sand.u32 %s25, 1
        %s273 = scalar_lea.sflag [#allocation6], %s272
        %s274 = sand.u32 %s73, 1
        %s275 = smul.addr %s274, 64
        %s276 = scalar_lea.vmem [#allocation5], %s275
        // Predicated region
        $region45: #{tpu_custom_call.1} parent=39 // pred_check
          %p277 = pneg %p86
        $region46: #{tpu_custom_call.1} parent=39 // pred_check_branch
          %279 = sbr.rel (%p277) target = $region48
        $region47: #{tpu_custom_call.1} parent=39 // pred_region
          %280 = dma.done %s273, 1024
        $region48: #{tpu_custom_call.1} parent=39 // pred_fallthru
          _
        // Predicated region
        $region49: #{tpu_custom_call.1} parent=39 // pred_check
          %p281 = pneg %p149
        $region50: #{tpu_custom_call.1} parent=39 // pred_check_branch
          %283 = sbr.rel (%p281) target = $region52
        $region51: #{tpu_custom_call.1} parent=39 // pred_region
          %284 = dma.done [#allocation6], 512
        $region52: #{tpu_custom_call.1} parent=39 // pred_fallthru
          _
        %s285 = sand.u32 %s45, 1
        %s286 = scalar_lea.sflag [#allocation3], %s285
        %s287 = sand.u32 %s45, 1
        %s288 = smul.addr %s287, 8
        %s289 = scalar_lea.vmem [#allocation2], %s288
        %p290 = pneg %p58
        %p291 = pneg %p55
        %s292 = sand.u32 %s25, 1
        %s293 = scalar_lea.sflag [#allocation6], %s292
        %s294 = sand.u32 %s73, 1
        %s295 = smul.addr %s294, 64
        %s296 = scalar_lea.vmem [#allocation5], %s295
        %p297 = pneg %p86
        %p298 = pneg %p83
        %p299 = pneg %p107
        %p300 = pneg %p104
        %p301 = pneg %p128
        %p302 = pneg %p125
        %p303 = pneg %p149
        %p304 = pneg %p146
        %p305 = pneg %p177
        %p306 = pneg %p174
        %s307 = sand.u32 %s164, 1
        %s308 = scalar_lea.sflag [#allocation4], %s307
        %s309 = sand.u32 %s164, 1
        %s310 = smul.addr %s309, 64
        %s311 = scalar_lea.vmem [#allocation8], %s310
        %s312 = smul.u32 2, %s30
        %s313 = smul.u32 2, %s30
        %v314 = vld [vmem:[%s267] sm:$0xff]
        %v315 = vld [vmem:[%s276] sm:$0xff]
        %v316 = vld [vmem:[%s276 + $0x8] sm:$0xff]
        %v317 = vld [vmem:[%s276 + $0x10] sm:$0xff]
        %v318 = vld [vmem:[%s276 + $0x18] sm:$0xff]
        %v319 = vld [vmem:[%s276 + $0x20] sm:$0xff]
        %v320 = vld [vmem:[%s276 + $0x28] sm:$0xff]
        %v321 = vld [vmem:[%s276 + $0x30] sm:$0xff]
        %v322 = vld [vmem:[%s276 + $0x38] sm:$0xff]
        %v323 = vld [vmem:[%s2] sm:$0x1]
        %v324 = vld [vmem:[%s3] sm:$0x1]
        %v325 = vld [vmem:[#allocation7] sm:$0xff]
        %v326 = vld [vmem:[#allocation7 + $0x8] sm:$0xff]
        %v327 = vld [vmem:[#allocation7 + $0x10] sm:$0xff]
        %v328 = vld [vmem:[#allocation7 + $0x18] sm:$0xff]
        %vm329 = vcmask 261120
        %v331 = vsel %vm329, %v323, 0
        %333 = vmatprep.subr.mxu0 0.0
        %334 = vmatpush1.msra.mxu0 0.0
        %335 = vmatprep.subr.mxu0 0.0
        %336 = vmatpush1.msra.mxu0 0.0
        %337 = vmatprep.subr.mxu0 0.0
        %338 = vmatpush1.msra.mxu0 0.0
        %339 = vmatprep.subr.mxu0 0.0
        %340 = vmatpush1.msra.mxu0 0.0
        %341 = vmatprep.subr.mxu0 0.0
        %342 = vmatpush1.msra.mxu0 0.0
        %343 = vmatprep.subr.mxu0 0.0
        %344 = vmatpush1.msra.mxu0 0.0
        %345 = vmatprep.subr.mxu0 0.0
        %346 = vmatpush1.msra.mxu0 0.0
        %347 = vmatprep.subr.mxu0 0.0
        %348 = vmatpush1.msra.mxu0 0.0
        %349 = vmatprep.subr.mxu0 0.0
        %350 = vmatpush1.msra.mxu0 0.0
        %351 = vmatprep.subr.mxu0 0.0
        %352 = vmatpush1.msra.mxu0 0.0
        %353 = vmatprep.subr.mxu0 0.0
        %354 = vmatpush1.msra.mxu0 0.0
        %355 = vmatprep.subr.mxu0 0.0
        %356 = vmatpush1.msra.mxu0 0.0
        %357 = vmatprep.subr.mxu0 %v322
        %358 = vmatpush1.msra.mxu0 %v321
        %359 = vmatprep.subr.mxu0 %v320
        %360 = vmatpush1.msra.mxu0 %v319
        %361 = vmatprep.subr.mxu0 %v318
        %362 = vmatpush1.msra.mxu0 %v317
        %363 = vmatprep.subr.mxu0 %v316
        %364 = vmatpush1.msra.mxu0 %v315
        %365 = vmatprep.subr.mxu0 0.0
        %366 = vmatpush2.msra.mxu0 0.0
        %367 = vmatprep.subr.mxu0 0.0
        %368 = vmatpush2.msra.mxu0 0.0
        %369 = vmatprep.subr.mxu0 0.0
        %370 = vmatpush2.msra.mxu0 0.0
        %371 = vmatprep.subr.mxu0 0.0
        %372 = vmatpush2.msra.mxu0 0.0
        %373 = vmatprep.subr.mxu0 0.0
        %374 = vmatpush2.msra.mxu0 0.0
        %375 = vmatprep.subr.mxu0 0.0
        %376 = vmatpush2.msra.mxu0 0.0
        %377 = vmatprep.subr.mxu0 0.0
        %378 = vmatpush2.msra.mxu0 0.0
        %379 = vmatprep.subr.mxu0 0.0
        %380 = vmatpush2.msra.mxu0 0.0
        %381 = vmatprep.subr.mxu0 0.0
        %382 = vmatpush2.msra.mxu0 0.0
        %383 = vmatprep.subr.mxu0 0.0
        %384 = vmatpush2.msra.mxu0 0.0
        %385 = vmatprep.subr.mxu0 0.0
        %386 = vmatpush2.msra.mxu0 0.0
        %387 = vmatprep.subr.mxu0 0.0
        %388 = vmatpush2.msra.mxu0 0.0
        %389 = vmatprep.subr.mxu0 0.0
        %390 = vmatpush2.msra.mxu0 0.0
        %391 = vmatprep.subr.mxu0 0.0
        %392 = vmatpush2.msra.mxu0 0.0
        %393 = vmatprep.subr.mxu0 0.0
        %394 = vmatpush2.msra.mxu0 0.0
        %395 = vmatprep.subr.mxu0 0.0
        %396 = vmatpush2.msra.mxu0 0.0
        %397 = vmatprep.mubr.f32.mxu0 0.0
        %398 = vmatmul.mubr.f32.gmra.mxu0 %v331
        %v399 = vpop.f32.mrf.mxu0
        %v400 = vadd.f32 0.0, %v399
        %v401 = vpop.f32.mrf.mxu0
        %v402 = vadd.f32 0.0, %v401
        %403 = vdwg.mxu0
        %v405 = vlaneseq
        %v406 = vshrl.u32 %v405, 7
        %v407 = vsub.s32 0, %v406
        %v408 = vrot.slane %v324, %v407
        %v410 = vmul.f32 %v314, %v408
        %v411 = vsel %vm329, %v410, 0.0
        %412 = vadd.xlane.f32.xlu0 %v411
        %v413 = vpop.xlane.xlu0 %412
        %v414 = vlaneseq
        %v415 = vshrl.u32 %v414, 7
        %v416 = vsub.s32 0, %v415
        %v417 = vrot.slane %v400, %v416
        %v418 = vlaneseq
        %v419 = vshrl.u32 %v418, 7
        %v420 = vsub.s32 0, %v419
        %v421 = vrot.slane %v402, %v420
        %v422 = vadd.f32 %v413, %v417
        %v423 = vadd.f32 %v413, %v421
        %v424 = vrot.slane %v422, 4
        %v425 = vmax.f32 %v422, %v424
        %v426 = vrot.slane %v425, 2
        %v427 = vmax.f32 %v425, %v426
        %v428 = vrot.slane %v427, 1
        %v429 = vmax.f32 %v427, %v428
        %v430 = vrot.slane %v423, 4
        %v431 = vmax.f32 %v423, %v430
        %v432 = vrot.slane %v431, 2
        %v433 = vmax.f32 %v431, %v432
        %v434 = vrot.slane %v433, 1
        %v435 = vmax.f32 %v433, %v434
        %v436 = vsub.f32 %v422, %v429
        %v437 = vsub.f32 %v423, %v435
        %v438 = vmul.f32 %v436, 1.442695
        %v439 = vpow.pop %v438
        %v440 = vmul.f32 %v437, 1.442695
        %v441 = vpow.pop %v440
        %v442 = vrot.slane %v439, 4
        %v443 = vadd.f32 %v439, %v442
        %v444 = vrot.slane %v443, 2
        %v445 = vadd.f32 %v443, %v444
        %v446 = vrot.slane %v445, 1
        %v447 = vadd.f32 %v445, %v446
        %v448 = vrot.slane %v441, 4
        %v449 = vadd.f32 %v441, %v448
        %v450 = vrot.slane %v449, 2
        %v451 = vadd.f32 %v449, %v450
        %v452 = vrot.slane %v451, 1
        %v453 = vadd.f32 %v451, %v452
        %v454 = vrcp.pop %v447
        %v455 = vrcp.pop %v453
        %v456 = vmul.f32 %v439, %v454
        %v457 = vmul.f32 %v441, %v455
        %458 = vxpose.xlu0.b32.start [1/16] %v325, 128
        %459 = vxpose.xlu0.b32.cont [2/16] %v326, 128
        %460 = vxpose.xlu0.b32.cont [3/16] %v327, 128
        %461 = vxpose.xlu0.b32.cont [4/16] %v328, 128
        %462 = vxpose.xlu0.b32.cont [5/16] 0.0, 128
        %463 = vxpose.xlu0.b32.cont [6/16] 0.0, 128
        %464 = vxpose.xlu0.b32.cont [7/16] 0.0, 128
        %465 = vxpose.xlu0.b32.cont [8/16] 0.0, 128
        %466 = vxpose.xlu0.b32.cont [9/16] 0.0, 128
        %467 = vxpose.xlu0.b32.cont [10/16] 0.0, 128
        %468 = vxpose.xlu0.b32.cont [11/16] 0.0, 128
        %469 = vxpose.xlu0.b32.cont [12/16] 0.0, 128
        %470 = vxpose.xlu0.b32.cont [13/16] 0.0, 128
        %471 = vxpose.xlu0.b32.cont [14/16] 0.0, 128
        %472 = vxpose.xlu0.b32.cont [15/16] 0.0, 128
        %473 = vxpose.xlu0.b32.end [16/16] 0.0, 128
        %v474 = vpop.trf.xlu0
        %v475 = vpop.trf.xlu0
        %v476 = vpop.trf.xlu0
        %v477 = vpop.trf.xlu0
        %v478 = vpop.trf.xlu0
        %v479 = vpop.trf.xlu0
        %v480 = vpop.trf.xlu0
        %v481 = vpop.trf.xlu0
        %v482 = vpop.trf.xlu0
        %v483 = vpop.trf.xlu0
        %v484 = vpop.trf.xlu0
        %v485 = vpop.trf.xlu0
        %v486 = vpop.trf.xlu0
        %v487 = vpop.trf.xlu0
        %v488 = vpop.trf.xlu0
        %v489 = vpop.trf.xlu0
        %v491 = vsel %vm329, %v474, 0
        %v494 = vsel %vm329, %v475, 0
        %v497 = vsel %vm329, %v476, 0
        %v500 = vsel %vm329, %v477, 0
        %v503 = vsel %vm329, %v314, 0
        %505 = vmatprep.subr.mxu0 0.0
        %506 = vmatpush1.xpose.msra.mxu0 0.0
        %507 = vmatprep.subr.mxu0 0.0
        %508 = vmatpush1.xpose.msra.mxu0 0.0
        %509 = vmatprep.subr.mxu0 0.0
        %510 = vmatpush1.xpose.msra.mxu0 0.0
        %511 = vmatprep.subr.mxu0 0.0
        %512 = vmatpush1.xpose.msra.mxu0 0.0
        %513 = vmatprep.subr.mxu0 0.0
        %514 = vmatpush1.xpose.msra.mxu0 0.0
        %515 = vmatprep.subr.mxu0 0.0
        %516 = vmatpush1.xpose.msra.mxu0 0.0
        %517 = vmatprep.subr.mxu0 0.0
        %518 = vmatpush1.xpose.msra.mxu0 0.0
        %519 = vmatprep.subr.mxu0 0.0
        %520 = vmatpush1.xpose.msra.mxu0 0.0
        %521 = vmatprep.subr.mxu0 0.0
        %522 = vmatpush1.xpose.msra.mxu0 0.0
        %523 = vmatprep.subr.mxu0 0.0
        %524 = vmatpush1.xpose.msra.mxu0 0.0
        %525 = vmatprep.subr.mxu0 0.0
        %526 = vmatpush1.xpose.msra.mxu0 0.0
        %527 = vmatprep.subr.mxu0 0.0
        %528 = vmatpush1.xpose.msra.mxu0 0.0
        %529 = vmatprep.subr.mxu0 0.0
        %530 = vmatpush1.xpose.msra.mxu0 0.0
        %531 = vmatprep.subr.mxu0 0.0
        %532 = vmatpush1.xpose.msra.mxu0 0.0
        %533 = vmatprep.subr.mxu0 0.0
        %534 = vmatpush1.xpose.msra.mxu0 0.0
        %535 = vmatprep.subr.mxu0 0.0
        %536 = vmatpush1.xpose.msra.mxu0 %v503
        %537 = vmatprep.subr.mxu0 0.0
        %538 = vmatpush2.xpose.msra.mxu0 0.0
        %539 = vmatprep.subr.mxu0 0.0
        %540 = vmatpush2.xpose.msra.mxu0 0.0
        %541 = vmatprep.subr.mxu0 0.0
        %542 = vmatpush2.xpose.msra.mxu0 0.0
        %543 = vmatprep.subr.mxu0 0.0
        %544 = vmatpush2.xpose.msra.mxu0 0.0
        %545 = vmatprep.subr.mxu0 0.0
        %546 = vmatpush2.xpose.msra.mxu0 0.0
        %547 = vmatprep.subr.mxu0 0.0
        %548 = vmatpush2.xpose.msra.mxu0 0.0
        %549 = vmatprep.subr.mxu0 0.0
        %550 = vmatpush2.xpose.msra.mxu0 0.0
        %551 = vmatprep.subr.mxu0 0.0
        %552 = vmatpush2.xpose.msra.mxu0 0.0
        %553 = vmatprep.subr.mxu0 0.0
        %554 = vmatpush2.xpose.msra.mxu0 0.0
        %555 = vmatprep.subr.mxu0 0.0
        %556 = vmatpush2.xpose.msra.mxu0 0.0
        %557 = vmatprep.subr.mxu0 0.0
        %558 = vmatpush2.xpose.msra.mxu0 0.0
        %559 = vmatprep.subr.mxu0 0.0
        %560 = vmatpush2.xpose.msra.mxu0 0.0
        %561 = vmatprep.subr.mxu0 0.0
        %562 = vmatpush2.xpose.msra.mxu0 0.0
        %563 = vmatprep.subr.mxu0 0.0
        %564 = vmatpush2.xpose.msra.mxu0 0.0
        %565 = vmatprep.subr.mxu0 0.0
        %566 = vmatpush2.xpose.msra.mxu0 0.0
        %567 = vmatprep.subr.mxu0 0.0
        %568 = vmatpush2.xpose.msra.mxu0 0.0
        %569 = vmatprep.mubr.f32.mxu0 0.0
        %570 = vmatmul.mubr.f32.gmra.mxu0 %v491
        %v571 = vpop.f32.mrf.mxu0
        %v572 = vadd.f32 0.0, %v571
        %v573 = vpop.f32.mrf.mxu0
        %574 = vmatprep.mubr.f32.mxu0 0.0
        %575 = vmatmul.mubr.f32.gmra.mxu0 %v494
        %v576 = vpop.f32.mrf.mxu0
        %v577 = vadd.f32 0.0, %v576
        %v578 = vpop.f32.mrf.mxu0
        %579 = vmatprep.mubr.f32.mxu0 0.0
        %580 = vmatmul.mubr.f32.gmra.mxu0 %v497
        %v581 = vpop.f32.mrf.mxu0
        %v582 = vadd.f32 0.0, %v581
        %v583 = vpop.f32.mrf.mxu0
        %584 = vmatprep.mubr.f32.mxu0 0.0
        %585 = vmatmul.mubr.f32.gmra.mxu0 %v500
        %v586 = vpop.f32.mrf.mxu0
        %v587 = vadd.f32 0.0, %v586
        %v588 = vpop.f32.mrf.mxu0
        %589 = vdwg.mxu0
        %vm590 = vcmask 64512
        %v592 = vsel %vm590, %v572, 0
        %v595 = vsel %vm590, %v577, 0
        %v598 = vsel %vm590, %v582, 0
        %v601 = vsel %vm590, %v587, 0
        %603 = vmatprep.subr.mxu0 0.0
        %604 = vmatpush1.msra.mxu0 0.0
        %605 = vmatprep.subr.mxu0 0.0
        %606 = vmatpush1.msra.mxu0 0.0
        %607 = vmatprep.subr.mxu0 0.0
        %608 = vmatpush1.msra.mxu0 0.0
        %609 = vmatprep.subr.mxu0 0.0
        %610 = vmatpush1.msra.mxu0 0.0
        %611 = vmatprep.subr.mxu0 0.0
        %612 = vmatpush1.msra.mxu0 0.0
        %613 = vmatprep.subr.mxu0 0.0
        %614 = vmatpush1.msra.mxu0 0.0
        %615 = vmatprep.subr.mxu0 0.0
        %616 = vmatpush1.msra.mxu0 0.0
        %617 = vmatprep.subr.mxu0 0.0
        %618 = vmatpush1.msra.mxu0 0.0
        %619 = vmatprep.subr.mxu0 0.0
        %620 = vmatpush1.msra.mxu0 0.0
        %621 = vmatprep.subr.mxu0 0.0
        %622 = vmatpush1.msra.mxu0 0.0
        %623 = vmatprep.subr.mxu0 0.0
        %624 = vmatpush1.msra.mxu0 0.0
        %625 = vmatprep.subr.mxu0 0.0
        %626 = vmatpush1.msra.mxu0 0.0
        %627 = vmatprep.subr.mxu0 0.0
        %628 = vmatpush1.msra.mxu0 0.0
        %629 = vmatprep.subr.mxu0 0.0
        %630 = vmatpush1.msra.mxu0 0.0
        %631 = vmatprep.subr.mxu0 0.0
        %632 = vmatpush1.msra.mxu0 0.0
        %633 = vmatprep.subr.mxu0 %v457
        %634 = vmatpush1.msra.mxu0 %v456
        %635 = vmatprep.subr.mxu0 0.0
        %636 = vmatpush2.msra.mxu0 0.0
        %637 = vmatprep.subr.mxu0 0.0
        %638 = vmatpush2.msra.mxu0 0.0
        %639 = vmatprep.subr.mxu0 0.0
        %640 = vmatpush2.msra.mxu0 0.0
        %641 = vmatprep.subr.mxu0 0.0
        %642 = vmatpush2.msra.mxu0 0.0
        %643 = vmatprep.subr.mxu0 0.0
        %644 = vmatpush2.msra.mxu0 0.0
        %645 = vmatprep.subr.mxu0 0.0
        %646 = vmatpush2.msra.mxu0 0.0
        %647 = vmatprep.subr.mxu0 0.0
        %648 = vmatpush2.msra.mxu0 0.0
        %649 = vmatprep.subr.mxu0 0.0
        %650 = vmatpush2.msra.mxu0 0.0
        %651 = vmatprep.subr.mxu0 0.0
        %652 = vmatpush2.msra.mxu0 0.0
        %653 = vmatprep.subr.mxu0 0.0
        %654 = vmatpush2.msra.mxu0 0.0
        %655 = vmatprep.subr.mxu0 0.0
        %656 = vmatpush2.msra.mxu0 0.0
        %657 = vmatprep.subr.mxu0 0.0
        %658 = vmatpush2.msra.mxu0 0.0
        %659 = vmatprep.subr.mxu0 0.0
        %660 = vmatpush2.msra.mxu0 0.0
        %661 = vmatprep.subr.mxu0 0.0
        %662 = vmatpush2.msra.mxu0 0.0
        %663 = vmatprep.subr.mxu0 0.0
        %664 = vmatpush2.msra.mxu0 0.0
        %665 = vmatprep.subr.mxu0 0.0
        %666 = vmatpush2.msra.mxu0 0.0
        %667 = vmatprep.mubr.f32.mxu0 0.0
        %668 = vmatmul.mubr.f32.gmra.mxu0 %v592
        %v669 = vpop.f32.mrf.mxu0
        %v670 = vadd.f32 0.0, %v669
        %v671 = vpop.f32.mrf.mxu0
        %v672 = vadd.f32 0.0, %v671
        %673 = vmatprep.mubr.f32.mxu0 0.0
        %674 = vmatmul.mubr.f32.gmra.mxu0 %v595
        %v675 = vpop.f32.mrf.mxu0
        %v676 = vadd.f32 0.0, %v675
        %v677 = vpop.f32.mrf.mxu0
        %v678 = vadd.f32 0.0, %v677
        %679 = vmatprep.mubr.f32.mxu0 0.0
        %680 = vmatmul.mubr.f32.gmra.mxu0 %v598
        %v681 = vpop.f32.mrf.mxu0
        %v682 = vadd.f32 0.0, %v681
        %v683 = vpop.f32.mrf.mxu0
        %v684 = vadd.f32 0.0, %v683
        %685 = vmatprep.mubr.f32.mxu0 0.0
        %686 = vmatmul.mubr.f32.gmra.mxu0 %v601
        %v687 = vpop.f32.mrf.mxu0
        %v688 = vadd.f32 0.0, %v687
        %v689 = vpop.f32.mrf.mxu0
        %v690 = vadd.f32 0.0, %v689
        %691 = vdwg.mxu0
        %v692 = vmax.f32 %v670, 0.0
        %v693 = vmax.f32 %v672, 0.0
        %v694 = vmax.f32 %v676, 0.0
        %v695 = vmax.f32 %v678, 0.0
        %v696 = vmax.f32 %v682, 0.0
        %v697 = vmax.f32 %v684, 0.0
        %v698 = vmax.f32 %v688, 0.0
        %v699 = vmax.f32 %v690, 0.0
        %700 = vst [vmem:[%s311] sm:$0xff] %v692
        %701 = vst [vmem:[%s311 + $0x8] sm:$0xff] %v693
        %702 = vst [vmem:[%s311 + $0x10] sm:$0xff] %v694
        %703 = vst [vmem:[%s311 + $0x18] sm:$0xff] %v695
        %704 = vst [vmem:[%s311 + $0x20] sm:$0xff] %v696
        %705 = vst [vmem:[%s311 + $0x28] sm:$0xff] %v697
        %706 = vst [vmem:[%s311 + $0x30] sm:$0xff] %v698
        %707 = vst [vmem:[%s311 + $0x38] sm:$0xff] %v699
        %s708 = sand.u32 %s164, 1
        %s709 = scalar_lea.sflag [#allocation4], %s708
        %s710 = sand.u32 %s164, 1
        %s711 = smul.addr %s710, 64
        %s712 = scalar_lea.vmem [#allocation8], %s711
        // Predicated region
        $region53: #{tpu_custom_call.1} parent=39 // pred_check
          %p713 = pneg %p174
        $region54: #{tpu_custom_call.1} parent=39 // pred_check_branch
          %715 = sbr.rel (%p713) target = $region56
        $region55: #{tpu_custom_call.1} parent=39 // pred_region
          %s716 = smul.u32 2, %s30
          %s718 = ssub.s32 1024, 1024
          %719 = vsyncadd %s709, %s718
          %s720 = smul.addr %s29, 8
          %s721 = sadd.s32 %s716, %s720
          %s722 = smul.addr %s721, 128
          %s723 = scalar_lea.hbm %s5, %s722
          %s724 = sshll.u32 %s712, 4
          %s725 = int_to_ptr.vmem [resolvable:$true] %s724
          %730 = dma.vmem_to_hbm [thread:$0]  %s725, 1024, %s723, %s709, 256, 256, 16
        $region56: #{tpu_custom_call.1} parent=39 // pred_fallthru
          _
      $region40: #{tpu_custom_call.1} parent=5 // pred_fallthru
        _
      %p731 = scmp.le.s32.totalorder 2, %s20
      // Predicated region
      $region57: #{tpu_custom_call.1} parent=5 // pred_check
        %p732 = pneg %p731
      $region58: #{tpu_custom_call.1} parent=5 // pred_check_branch
        %734 = sbr.rel (%p732) target = $region60
      $region59: #{tpu_custom_call.1} parent=5 // pred_region
        %s735 = ssub.s32 %s20, 2
        // Predicated region
        $region61: #{tpu_custom_call.1} parent=59 // pred_check
          %p736 = pneg %p180
        $region62: #{tpu_custom_call.1} parent=59 // pred_check_branch
          %738 = sbr.rel (%p736) target = $region64
        $region63: #{tpu_custom_call.1} parent=59 // pred_region
          %s739 = sand.u32 %s165, 1
          %s740 = scalar_lea.sflag [#allocation4], %s739
          %s741 = sand.u32 %s165, 1
          %s742 = smul.addr %s741, 64
          %s743 = scalar_lea.vmem [#allocation8], %s742
          %744 = dma.done %s740, 1024
        $region64: #{tpu_custom_call.1} parent=59 // pred_fallthru
          _
      $region60: #{tpu_custom_call.1} parent=5 // pred_fallthru
        _
    $region6: #{tpu_custom_call.1} parent=1 // loop_footer
      %s24 = sadd.s32 1, %s20
    $region7: #{tpu_custom_call.1} parent=1 // loop_footer_branch
      %19 = sbr.rel target = $region3
    $region8: #{tpu_custom_call.1} parent=1 // loop_exit
      _
    %745 = vsyncpa [#allocation3], 1
    %s746 = scalar_lea.sflag [#allocation3], 1
    %747 = vsyncpa %s746, 1
    %748 = vsyncpa [#allocation6], 1
    %s749 = scalar_lea.sflag [#allocation6], 1
    %750 = vsyncpa %s749, 1
    %751 = vsyncpa [#allocation4], 1
    %s752 = scalar_lea.sflag [#allocation4], 1
    %753 = vsyncpa %s752, 1

</llo_original>
